<compile_context>
chip_gen: v6e
topology: v6e:2x2x1
jax: 0.10.0
libtpu: 0.0.40
codegen_flags: <defaults>
</compile_context>

<pallas_src>
import jax
import jax.numpy as jnp
from jax.experimental import pallas as pl
from jax.experimental.pallas import tpu as pltpu


# --------------------------------------------------------------------------
# Kernels
# --------------------------------------------------------------------------
def _fused_kernel(x_ref, wt_ref, b_ref, o_ref):
    """Full-vocab path: logits = x @ Wt + b, then log_softmax along the lane
    (vocab) axis on the resident (tile_n, V) tile."""
    logits = jnp.dot(x_ref[...], wt_ref[...],
                     preferred_element_type=jnp.float32)
    logits = logits + b_ref[...]                       # (tile_n, V) + (1, V)
    m = jnp.max(logits, axis=-1, keepdims=True)        # XLU lane reduce
    shifted = logits - m
    lse = jnp.log(jnp.sum(jnp.exp(shifted), axis=-1, keepdims=True))
    o_ref[...] = (shifted - lse).astype(o_ref.dtype)


def _logits_lse_kernel(x_ref, wt_ref, b_ref, logits_ref, lse_ref, m_sc, l_sc):
    """Vocab-tiled pass 1: emit the logit strip for (row tile i, vocab tile j)
    and accumulate an online logsumexp per row (scratch m/l, f32)."""
    j = pl.program_id(1)

    @pl.when(j == 0)
    def _():
        m_sc[...] = jnp.full_like(m_sc, -jnp.inf)
        l_sc[...] = jnp.zeros_like(l_sc)

    logits = jnp.dot(x_ref[...], wt_ref[...],
                     preferred_element_type=jnp.float32)
    logits = logits + b_ref[...]                       # (tile_n, tv) + (1, tv)
    logits_ref[...] = logits.astype(logits_ref.dtype)

    m_new = jnp.maximum(m_sc[...], jnp.max(logits, axis=-1, keepdims=True))
    l_sc[...] = (l_sc[...] * jnp.exp(m_sc[...] - m_new)
                 + jnp.sum(jnp.exp(logits - m_new), axis=-1, keepdims=True))
    m_sc[...] = m_new

    @pl.when(j == pl.num_programs(1) - 1)
    def _():
        lse_ref[...] = m_sc[...] + jnp.log(l_sc[...])


def _finalize_kernel(logits_ref, lse_ref, o_ref):
    """Vocab-tiled pass 2: out = logits - lse (elementwise, lane-dense)."""
    o_ref[...] = (logits_ref[...] - lse_ref[...]).astype(o_ref.dtype)


# --------------------------------------------------------------------------
# Sizing helpers
# --------------------------------------------------------------------------
def _round_up(n, m):
    return -(-n // m) * m


def _vmem_budget():
    """~80% of this generation's physical VMEM (v5e/v6e 128 MiB, v7x 64 MiB).
    Used consistently for the tile picker and vmem_limit_bytes."""
    try:
        cap = int(pltpu.get_tpu_info().vmem_capacity_bytes)
    except Exception:
        cap = 64 << 20                                  # safe on every gen
    return int(cap * 0.8)


def _pick_tile_n_full(n_rows, d_model, vocab, w_bytes, out_bytes,
                      resident_bytes, budget):
    """Largest row tile whose double-buffered x/out blocks fit the budget next
    to the single-buffered resident weight.  Prefers big multiples of 128/256
    (MXU fill) but never pads a tiny batch to a huge tile."""
    ru = _round_up(max(n_rows, 8), 8)
    for t in (1024, 512, 256, 128, 64, 32, 16, 8):
        if t > 8 and t >= 2 * ru:
            continue                                    # excessive padding
        per_step = 2 * t * (d_model * w_bytes + vocab * out_bytes)
        if resident_bytes + per_step <= budget:
            return t
    return 8


def _pick_vocab_tiles(n_rows, d_model, vocab, w_bytes, budget):
    """Tile sizes for the vocab-tiled path: tile_n ~256 (MXU fill on v6e/v7x,
    128 already fills v5e), tile_v the largest 128-multiple divisor of V whose
    double-buffered strips fit the budget."""
    ru = _round_up(max(n_rows, 8), 8)
    tile_n = 256
    while tile_n > 8 and tile_n >= 2 * ru:
        tile_n //= 2
    tile_v = 128
    for tv in (4096, 2048, 1024, 512, 256, 128):
        if vocab % tv:
            continue
        foot = (2 * tile_n * d_model * w_bytes          # x blocks
                + 2 * d_model * tv * w_bytes            # weight strip blocks
                + 2 * tv * 4                            # bias strip blocks
                + 2 * tile_n * tv * 4                   # logits out blocks
                + 4 * tile_n * 4)                       # lse out + m/l scratch
        if foot <= budget:
            tile_v = tv
            break
    return tile_n, tile_v


# --------------------------------------------------------------------------
# pallas_call builders
# --------------------------------------------------------------------------
def _full_vocab_call(x2d, wt, b2d, tile_n, out_dtype, vmem_limit):
    n_rows, d_model = x2d.shape
    vocab = wt.shape[1]

    def build(use_buffered):
        res_kw = {"pipeline_mode": pl.Buffered(1)} if use_buffered else {}
        return pl.pallas_call(
            _fused_kernel,
            out_shape=jax.ShapeDtypeStruct((n_rows, vocab), out_dtype),
            grid_spec=pltpu.PrefetchScalarGridSpec(
                num_scalar_prefetch=0,
                grid=(n_rows // tile_n,),
                in_specs=[
                    pl.BlockSpec((tile_n, d_model), lambda i: (i, 0)),
                    # resident weight / bias: constant index -> single buffer
                    pl.BlockSpec((d_model, vocab), lambda i: (0, 0), **res_kw),
                    pl.BlockSpec((1, vocab), lambda i: (0, 0), **res_kw),
                ],
                out_specs=pl.BlockSpec((tile_n, vocab), lambda i: (i, 0)),
            ),
            compiler_params=pltpu.CompilerParams(
                # TODO(synk): verify the row axis shards across both v7x TCs;
                # if not, switch to pltpu.CORE_PARALLEL (weight then resident
                # per core, which interacts with the 64 MiB budget).
                dimension_semantics=("parallel",),
                vmem_limit_bytes=vmem_limit),
        )

    try:
        return build(True)(x2d, wt, b2d)
    except Exception:
        # Fallback for jax builds without BlockSpec(pipeline_mode=...).
        return build(False)(x2d, wt, b2d)


def _vocab_tiled_call(x2d, wt, b2d, tile_n, tile_v, out_dtype, vmem_limit):
    n_rows, d_model = x2d.shape
    vocab = wt.shape[1]
    grid = (n_rows // tile_n, vocab // tile_v)

    # Pass 1: logit strips + online logsumexp per row.
    # TODO(synk): allow a bf16 intermediate logits buffer to halve the extra
    # HBM round trip when the consumer tolerates the precision loss.
    logits, lse = pl.pallas_call(
        _logits_lse_kernel,
        out_shape=(jax.ShapeDtypeStruct((n_rows, vocab), jnp.float32),
                   jax.ShapeDtypeStruct((n_rows, 1), jnp.float32)),
        grid_spec=pltpu.PrefetchScalarGridSpec(
            num_scalar_prefetch=0,
            grid=grid,
            in_specs=[
                pl.BlockSpec((tile_n, d_model), lambda i, j: (i, 0)),
                pl.BlockSpec((d_model, tile_v), lambda i, j: (0, j)),
                pl.BlockSpec((1, tile_v), lambda i, j: (0, j)),
            ],
            out_specs=[
                pl.BlockSpec((tile_n, tile_v), lambda i, j: (i, j)),
                pl.BlockSpec((tile_n, 1), lambda i, j: (i, 0)),
            ],
            scratch_shapes=[pltpu.VMEM((tile_n, 1), jnp.float32),
                            pltpu.VMEM((tile_n, 1), jnp.float32)],
        ),
        compiler_params=pltpu.CompilerParams(
            dimension_semantics=("parallel", "arbitrary"),
            vmem_limit_bytes=vmem_limit),
    )(x2d, wt, b2d)

    # Pass 2: elementwise finalize (lane-dense output blocks).
    out = pl.pallas_call(
        _finalize_kernel,
        out_shape=jax.ShapeDtypeStruct((n_rows, vocab), out_dtype),
        grid_spec=pltpu.PrefetchScalarGridSpec(
            num_scalar_prefetch=0,
            grid=grid,
            in_specs=[
                pl.BlockSpec((tile_n, tile_v), lambda i, j: (i, j)),
                pl.BlockSpec((tile_n, 1), lambda i, j: (i, 0)),
            ],
            out_specs=pl.BlockSpec((tile_n, tile_v), lambda i, j: (i, j)),
        ),
        compiler_params=pltpu.CompilerParams(
            dimension_semantics=("parallel", "parallel"),
            vmem_limit_bytes=vmem_limit),
    )(logits, lse)
    return out


# --------------------------------------------------------------------------
# Public API
# --------------------------------------------------------------------------
def prepare_generator_params(weight, bias, compute_dtype=jnp.bfloat16):
    """One-time parameter prep (do at load time, NOT per forward call):
    transpose to (d_model, vocab) and cast to the MXU compute dtype.
    weight: (vocab, d_model); bias: (vocab,)."""
    vocab, d_model = weight.shape
    wt = jnp.asarray(weight).T.astype(compute_dtype)          # (d_model, V)
    b2d = jnp.asarray(bias).reshape(1, vocab).astype(jnp.float32)
    return wt, b2d


def generator_forward(x, wt, b2d, *, out_dtype=jnp.float32,
                      tile_n=None, tile_v=None, vmem_budget_bytes=None):
    """x: (..., d_model); wt: (d_model, vocab) in the compute dtype (bf16 by
    default, see prepare_generator_params); b2d: (1, vocab) f32.
    Returns (..., vocab) log-probabilities in `out_dtype` (matmul accumulation
    and all softmax math are f32 regardless of the compute/output dtype)."""
    d_model, vocab = wt.shape
    assert x.shape[-1] == d_model
    assert b2d.shape == (1, vocab)
    lead = x.shape[:-1]

    compute_dtype = wt.dtype
    x2d = x.reshape(-1, d_model).astype(compute_dtype)
    n_rows = x2d.shape[0]

    budget = int(vmem_budget_bytes) if vmem_budget_bytes else _vmem_budget()
    w_bytes = jnp.dtype(compute_dtype).itemsize
    out_bytes = jnp.dtype(out_dtype).itemsize

    # Resident (single-buffered) W^T + bias footprint for the full-vocab path.
    resident = vocab * d_model * w_bytes + vocab * 4
    min_step = 2 * 8 * (d_model * w_bytes + vocab * out_bytes)
    full_fits = resident + min_step <= budget

    # TODO(synk): if vocab is not a multiple of 128 AND the full weight does
    # not fit VMEM, pad the vocab axis (with a large-negative bias) instead of
    # forcing the full-vocab path.
    use_full_vocab = (tile_v is None) and (full_fits or vocab % 128 != 0)

    if use_full_vocab:
        if tile_n is None:
            tile_n = _pick_tile_n_full(n_rows, d_model, vocab, w_bytes,
                                       out_bytes, resident, budget)
        assert tile_n % 8 == 0
        padded = _round_up(max(n_rows, 1), tile_n)
        if padded != n_rows:
            x2d = jnp.pad(x2d, ((0, padded - n_rows), (0, 0)))
        out = _full_vocab_call(x2d, wt, b2d, tile_n, out_dtype, budget)
    else:
        tn, tv = _pick_vocab_tiles(n_rows, d_model, vocab, w_bytes, budget)
        tile_n = tile_n if tile_n is not None else tn
        tile_v = tile_v if tile_v is not None else tv
        assert tile_n % 8 == 0
        assert tile_v % 128 == 0 and vocab % tile_v == 0
        padded = _round_up(max(n_rows, 1), tile_n)
        if padded != n_rows:
            x2d = jnp.pad(x2d, ((0, padded - n_rows), (0, 0)))
        out = _vocab_tiled_call(x2d, wt, b2d, tile_n, tile_v, out_dtype,
                                budget)

    if padded != n_rows:
        out = out[:n_rows]
    return out.reshape(*lead, vocab)


# --------------------------------------------------------------------------
# Reference + self-test
# --------------------------------------------------------------------------
def _reference(x, weight, bias):
    logits = jnp.einsum("...d,vd->...v", x, weight) + bias
    return jax.nn.log_softmax(logits, axis=-1)


if __name__ == "__main__":
    D_MODEL = 32
    VOCAB = 256
    BATCH, SEQ = 2, 8

    key = jax.random.PRNGKey(0)
    kx, kw, kb = jax.random.split(key, 3)

    x = jax.random.normal(kx, (BATCH, SEQ, D_MODEL), dtype=jnp.float32)
    weight = (jax.random.normal(kw, (VOCAB, D_MODEL), dtype=jnp.float32)
              / jnp.sqrt(D_MODEL))
    bias = jax.random.normal(kb, (VOCAB,), dtype=jnp.float32) * 0.01

    ref = _reference(x, weight, bias)

    # 1) f32 compute path: tight check of the fused kernel math.
    wt32, b2d = prepare_generator_params(weight, bias,
                                         compute_dtype=jnp.float32)
    out32 = jax.block_until_ready(generator_forward(x, wt32, b2d))
    assert out32.shape == (BATCH, SEQ, VOCAB), out32.shape
    assert jnp.allclose(out32, ref, rtol=1e-5, atol=1e-5), (
        float(jnp.max(jnp.abs(out32 - ref))))

    # 2) default bf16-MXU path (production config): bf16-operand tolerance.
    wt16, b2d16 = prepare_generator_params(weight, bias)   # bf16 weights
    out16 = jax.block_until_ready(generator_forward(x, wt16, b2d16))
    assert out16.shape == (BATCH, SEQ, VOCAB), out16.shape
    assert jnp.allclose(out16, ref, rtol=5e-2, atol=5e-2), (
        float(jnp.max(jnp.abs(out16 - ref))))
    # log-probs must still normalize exactly (softmax math is f32).
    assert jnp.allclose(jax.scipy.special.logsumexp(out16, axis=-1), 0.0,
                        atol=1e-4)

    # 3) force the vocab-tiled (large-V) path on the small shape to exercise
    #    the online-logsumexp + finalize pipeline end to end.
    outvt = jax.block_until_ready(
        generator_forward(x, wt32, b2d, tile_n=8, tile_v=128))
    assert outvt.shape == (BATCH, SEQ, VOCAB), outvt.shape
    assert jnp.allclose(outvt, ref, rtol=1e-5, atol=1e-5), (
        float(jnp.max(jnp.abs(outvt - ref))))

    print("KERNEL_OK")
</pallas_src>

<mosaic_0001>
module attributes {stable_mosaic.version = 11 : i64} {
  func.func @_fused_kernel(%arg0: i32, %arg1: memref<16x32xf32, #tpu.memory_space<vmem>>, %arg2: memref<32x256xf32, #tpu.memory_space<vmem>>, %arg3: memref<1x256xf32, #tpu.memory_space<vmem>>, %arg4: memref<16x256xf32, #tpu.memory_space<vmem>>) attributes {dimension_semantics = [#tpu.dimension_semantics<parallel>], iteration_bounds = array<i64: 1>, scalar_prefetch = 0 : i64, scratch_operands = 0 : i64, tpu.core_type = #tpu.core_type<tc>, window_params = [{transform_indices = @transform_0, window_bounds = array<i64: 16, 32>}, {pipeline_mode = #tpu.pipeline_mode<synchronous>, transform_indices = @transform_1, window_bounds = array<i64: 32, 256>}, {pipeline_mode = #tpu.pipeline_mode<synchronous>, transform_indices = @transform_2, window_bounds = array<i64: 1, 256>}, {transform_indices = @transform_3, window_bounds = array<i64: 16, 256>}]} {
    %c0 = arith.constant 0 : index
    %c0_0 = arith.constant 0 : index
    %0 = vector.load %arg1[%c0, %c0_0] : memref<16x32xf32, #tpu.memory_space<vmem>>, vector<16x32xf32>
    %c0_1 = arith.constant 0 : index
    %c0_2 = arith.constant 0 : index
    %1 = vector.load %arg2[%c0_1, %c0_2] : memref<32x256xf32, #tpu.memory_space<vmem>>, vector<32x256xf32>
    %cst = arith.constant dense<0.000000e+00> : vector<16x256xf32>
    %2 = tpu.matmul %0, %1, %cst {dimension_numbers = #tpu.dot_dimension_numbers<[1], [0], [0], [1], [0, 0, 1, 1], [], []>} : vector<16x32xf32>, vector<32x256xf32>, vector<16x256xf32> -> vector<16x256xf32>
    %c0_3 = arith.constant 0 : index
    %c0_4 = arith.constant 0 : index
    %3 = vector.load %arg3[%c0_3, %c0_4] : memref<1x256xf32, #tpu.memory_space<vmem>>, vector<1x256xf32>
    %4 = vector.broadcast %3 : vector<1x256xf32> to vector<16x256xf32>
    %5 = arith.addf %2, %4 : vector<16x256xf32>
    %cst_5 = arith.constant dense<0xFF800000> : vector<16xf32>
    %6 = vector.multi_reduction <maximumf>, %5, %cst_5 [1] : vector<16x256xf32> to vector<16xf32>
    %7 = vector.shape_cast %6 : vector<16xf32> to vector<16x1xf32>
    %8 = vector.broadcast %7 : vector<16x1xf32> to vector<16x256xf32>
    %9 = arith.subf %5, %8 : vector<16x256xf32>
    %10 = math.exp %9 : vector<16x256xf32>
    %cst_6 = arith.constant dense<0.000000e+00> : vector<16xf32>
    %11 = vector.multi_reduction <add>, %10, %cst_6 [1] : vector<16x256xf32> to vector<16xf32>
    %12 = vector.shape_cast %11 : vector<16xf32> to vector<16x1xf32>
    %13 = math.log %12 : vector<16x1xf32>
    %14 = vector.broadcast %13 : vector<16x1xf32> to vector<16x256xf32>
    %15 = arith.subf %9, %14 : vector<16x256xf32>
    %c0_7 = arith.constant 0 : index
    %c0_8 = arith.constant 0 : index
    %16 = vector.load %arg4[%c0_7, %c0_8] : memref<16x256xf32, #tpu.memory_space<vmem>>, vector<16x256xf32>
    tpu.vector_store %arg4[%c0_7, %c0_8], %15 {strides = array<i32>} : memref<16x256xf32, #tpu.memory_space<vmem>>, vector<16x256xf32>,
    return
  }
  func.func @transform_0(%arg0: i32) -> (i32, i32) {
    %c0_i32 = arith.constant 0 : i32
    %c0_i32_0 = arith.constant 0 : i32
    return %arg0, %c0_i32 : i32, i32
  }
  func.func @transform_1(%arg0: i32) -> (i32, i32) {
    %c0_i32 = arith.constant 0 : i32
    %c0_i32_0 = arith.constant 0 : i32
    %c0_i32_1 = arith.constant 0 : i32
    return %c0_i32, %c0_i32_0 : i32, i32
  }
  func.func @transform_2(%arg0: i32) -> (i32, i32) {
    %c0_i32 = arith.constant 0 : i32
    %c0_i32_0 = arith.constant 0 : i32
    %c0_i32_1 = arith.constant 0 : i32
    return %c0_i32, %c0_i32_0 : i32, i32
  }
  func.func @transform_3(%arg0: i32) -> (i32, i32) {
    %c0_i32 = arith.constant 0 : i32
    %c0_i32_0 = arith.constant 0 : i32
    return %arg0, %c0_i32 : i32, i32
  }
}

module attributes {stable_mosaic.version = 11 : i64} {
  func.func @_fused_kernel(%arg0: i32, %arg1: memref<16x32xf32, #tpu.memory_space<vmem>>, %arg2: memref<32x256xf32, #tpu.memory_space<vmem>>, %arg3: memref<1x256xf32, #tpu.memory_space<vmem>>, %arg4: memref<16x256xf32, #tpu.memory_space<vmem>>) attributes {dimension_semantics = [#tpu.dimension_semantics<parallel>], iteration_bounds = array<i64: 1>, scalar_prefetch = 0 : i64, scratch_operands = 0 : i64, tpu.core_type = #tpu.core_type<tc>, window_params = [{transform_indices = @transform_0, window_bounds = array<i64: 16, 32>}, {pipeline_mode = #tpu.pipeline_mode<synchronous>, transform_indices = @transform_1, window_bounds = array<i64: 32, 256>}, {pipeline_mode = #tpu.pipeline_mode<synchronous>, transform_indices = @transform_2, window_bounds = array<i64: 1, 256>}, {transform_indices = @transform_3, window_bounds = array<i64: 16, 256>}]} {
    %c0 = arith.constant 0 : index
    %c0_0 = arith.constant 0 : index
    %0 = vector.load %arg1[%c0, %c0_0] : memref<16x32xf32, #tpu.memory_space<vmem>>, vector<16x32xf32>
    %c0_1 = arith.constant 0 : index
    %c0_2 = arith.constant 0 : index
    %1 = vector.load %arg2[%c0_1, %c0_2] : memref<32x256xf32, #tpu.memory_space<vmem>>, vector<32x256xf32>
    %cst = arith.constant dense<0.000000e+00> : vector<16x256xf32>
    %2 = tpu.matmul %0, %1, %cst {dimension_numbers = #tpu.dot_dimension_numbers<[1], [0], [0], [1], [0, 0, 1, 1], [], []>} : vector<16x32xf32>, vector<32x256xf32>, vector<16x256xf32> -> vector<16x256xf32>
    %c0_3 = arith.constant 0 : index
    %c0_4 = arith.constant 0 : index
    %3 = vector.load %arg3[%c0_3, %c0_4] : memref<1x256xf32, #tpu.memory_space<vmem>>, vector<1x256xf32>
    %4 = vector.broadcast %3 : vector<1x256xf32> to vector<16x256xf32>
    %5 = arith.addf %2, %4 : vector<16x256xf32>
    %cst_5 = arith.constant dense<0xFF800000> : vector<16xf32>
    %6 = vector.multi_reduction <maximumf>, %5, %cst_5 [1] : vector<16x256xf32> to vector<16xf32>
    %7 = vector.shape_cast %6 : vector<16xf32> to vector<16x1xf32>
    %8 = vector.broadcast %7 : vector<16x1xf32> to vector<16x256xf32>
    %9 = arith.subf %5, %8 : vector<16x256xf32>
    %10 = math.exp %9 : vector<16x256xf32>
    %cst_6 = arith.constant dense<0.000000e+00> : vector<16xf32>
    %11 = vector.multi_reduction <add>, %10, %cst_6 [1] : vector<16x256xf32> to vector<16xf32>
    %12 = vector.shape_cast %11 : vector<16xf32> to vector<16x1xf32>
    %13 = math.log %12 : vector<16x1xf32>
    %14 = vector.broadcast %13 : vector<16x1xf32> to vector<16x256xf32>
    %15 = arith.subf %9, %14 : vector<16x256xf32>
    %c0_7 = arith.constant 0 : index
    %c0_8 = arith.constant 0 : index
    %16 = vector.load %arg4[%c0_7, %c0_8] : memref<16x256xf32, #tpu.memory_space<vmem>>, vector<16x256xf32>
    tpu.vector_store %arg4[%c0_7, %c0_8], %15 {strides = array<i32>} : memref<16x256xf32, #tpu.memory_space<vmem>>, vector<16x256xf32>,
    return
  }
  func.func @transform_0(%arg0: i32) -> (i32, i32) {
    %c0_i32 = arith.constant 0 : i32
    %c0_i32_0 = arith.constant 0 : i32
    return %arg0, %c0_i32 : i32, i32
  }
  func.func @transform_1(%arg0: i32) -> (i32, i32) {
    %c0_i32 = arith.constant 0 : i32
    %c0_i32_0 = arith.constant 0 : i32
    %c0_i32_1 = arith.constant 0 : i32
    return %c0_i32, %c0_i32_0 : i32, i32
  }
  func.func @transform_2(%arg0: i32) -> (i32, i32) {
    %c0_i32 = arith.constant 0 : i32
    %c0_i32_0 = arith.constant 0 : i32
    %c0_i32_1 = arith.constant 0 : i32
    return %c0_i32, %c0_i32_0 : i32, i32
  }
  func.func @transform_3(%arg0: i32) -> (i32, i32) {
    %c0_i32 = arith.constant 0 : i32
    %c0_i32_0 = arith.constant 0 : i32
    return %arg0, %c0_i32 : i32, i32
  }
}

</mosaic_0001>

<llo_original>
// kernel: tpu_custom_call.1
$region0: #{tpu_custom_call.1}
  #allocation0 [shape = 'u32[]', space=smem, size = 0x4, offset = 0x4, fixed_abs, tag = 'smem constant byte address 0x4 - core index']
  #allocation1 [shape = 'u32[144,128]{1,0:T(1,128)}', space=vmem, size = 0x12000, scoped, tag = 'internal scratch']
  %s0 = inlined_call_operand.hbm [shape: f32[16,32], index: 0, kind: input, shape index: {}]
  %s1 = inlined_call_operand.hbm [shape: f32[32,256], index: 1, kind: input, shape index: {}]
  %s2 = inlined_call_operand.vmem [shape: f32[1,256], index: 2, kind: input, shape index: {}]
  %s3 = inlined_call_operand.hbm [shape: f32[16,256], index: 3, kind: output, shape index: {}]
  %s4 = sld [smem:[#allocation0]]
  $region30: #{tpu_custom_call.1} parent=0
    _
  %s6 = ssub.s32 1, %s4
  %s7 = scalar_select 0, %s6, %s4
  $region1: #{tpu_custom_call.1} parent=0
    #allocation2 [shape = 'u8[8192]{0}', space=vmem, size = 0x2000, scoped, tag = 'input window, operand 0, single buffered']
    #allocation3 [shape = 's32[1]{0}', space=sflag, size = 0x4, scoped, tag = 'scoped memory for tpu_custom_call.1']
    #allocation4 [shape = 's32[1]{0}', space=sflag, size = 0x4, scoped, tag = 'scoped memory for tpu_custom_call.1']
    #allocation5 [shape = 'u8[32768]{0}', space=vmem, size = 0x8000, scoped, tag = 'input window, operand 1, single buffered']
    #allocation6 [shape = 's32[1]{0}', space=sflag, size = 0x4, scoped, tag = 'scoped memory for tpu_custom_call.1']
    #allocation7 [shape = 'u8[16384]{0}', space=vmem, size = 0x4000, scoped, tag = 'output window, operand 0, single buffered']
    %8 = vsyncpa [#allocation3], 0
    %9 = vsyncpa [#allocation6], 0
    %10 = vsyncpa [#allocation4], 0
    // Predicated region
    $region2: #{tpu_custom_call.1} parent=1 // pred_check
      _
    $region3: #{tpu_custom_call.1} parent=1 // pred_check_branch
      %12 = sbr.rel (0) target = $region5
    $region4: #{tpu_custom_call.1} parent=1 // pred_region
      %s14 = ssub.s32 256, 256
      %15 = vsyncadd [#allocation3], %s14
      %s16 = sshll.u32 [#allocation2], 4
      %s17 = int_to_ptr.vmem [resolvable:$true] %s16
      %22 = dma.hbm_to_vmem [thread:$0]  %s0, 256, %s17, [#allocation3], 128, 128, 8
    $region5: #{tpu_custom_call.1} parent=1 // pred_fallthru
      _
    // Predicated region
    $region6: #{tpu_custom_call.1} parent=1 // pred_check
      _
    $region7: #{tpu_custom_call.1} parent=1 // pred_check_branch
      %24 = sbr.rel (0) target = $region9
    $region8: #{tpu_custom_call.1} parent=1 // pred_region
      %s26 = ssub.s32 1024, 1024
      %27 = vsyncadd [#allocation6], %s26
      %s28 = sshll.u32 [#allocation5], 4
      %s29 = int_to_ptr.vmem [resolvable:$true] %s28
      %34 = dma.hbm_to_vmem [thread:$0]  %s1, 1024, %s29, [#allocation6], 256, 256, 16
    $region9: #{tpu_custom_call.1} parent=1 // pred_fallthru
      _
    // Predicated region
    $region10: #{tpu_custom_call.1} parent=1 // pred_check
      _
    $region11: #{tpu_custom_call.1} parent=1 // pred_check_branch
      %36 = sbr.rel (0) target = $region13
    $region12: #{tpu_custom_call.1} parent=1 // pred_region
      _
    $region13: #{tpu_custom_call.1} parent=1 // pred_fallthru
      _
    // Predicated region
    $region14: #{tpu_custom_call.1} parent=1 // pred_check
      _
    $region15: #{tpu_custom_call.1} parent=1 // pred_check_branch
      %38 = sbr.rel (0) target = $region17
    $region16: #{tpu_custom_call.1} parent=1 // pred_region
      %39 = dma.done [#allocation3], 256
    $region17: #{tpu_custom_call.1} parent=1 // pred_fallthru
      _
    // Predicated region
    $region18: #{tpu_custom_call.1} parent=1 // pred_check
      _
    $region19: #{tpu_custom_call.1} parent=1 // pred_check_branch
      %41 = sbr.rel (0) target = $region21
    $region20: #{tpu_custom_call.1} parent=1 // pred_region
      %42 = dma.done [#allocation6], 1024
    $region21: #{tpu_custom_call.1} parent=1 // pred_fallthru
      _
    %v43 = vld [vmem:[#allocation2] sm:$0xff]
    %v44 = vld [vmem:[#allocation2 + $0x8] sm:$0xff]
    %v45 = vld [vmem:[#allocation5] sm:$0xff]
    %v46 = vld [vmem:[#allocation5 + $0x8] sm:$0xff]
    %v47 = vld [vmem:[#allocation5 + $0x10] sm:$0xff]
    %v48 = vld [vmem:[#allocation5 + $0x18] sm:$0xff]
    %v49 = vld [vmem:[#allocation5 + $0x20] sm:$0xff]
    %v50 = vld [vmem:[#allocation5 + $0x28] sm:$0xff]
    %v51 = vld [vmem:[#allocation5 + $0x30] sm:$0xff]
    %v52 = vld [vmem:[#allocation5 + $0x38] sm:$0xff]
    %v53 = vld [vmem:[%s2] sm:$0x3]
    %v55 = vlaneseq
    %v56 = vshrl.u32 %v55, 7
    %v57 = vsub.s32 0, %v56
    %v58 = vrot.slane %v53, %v57
    %v59 = vlaneseq
    %v60 = vshrl.u32 %v59, 7
    %v61 = vsub.s32 1, %v60
    %v62 = vrot.slane %v53, %v61
    %vm65 = vcmask 261120
    %v67 = vsel %vm65, %v43, 0
    %v70 = vsel %vm65, %v44, 0
    %72 = vmatprep.subr.mxu0 0.0
    %73 = vmatpush1.msra.mxu0 0.0
    %74 = vmatprep.subr.mxu0 0.0
    %75 = vmatpush1.msra.mxu0 0.0
    %76 = vmatprep.subr.mxu0 0.0
    %77 = vmatpush1.msra.mxu0 0.0
    %78 = vmatprep.subr.mxu0 0.0
    %79 = vmatpush1.msra.mxu0 0.0
    %80 = vmatprep.subr.mxu0 0.0
    %81 = vmatpush1.msra.mxu0 0.0
    %82 = vmatprep.subr.mxu0 0.0
    %83 = vmatpush1.msra.mxu0 0.0
    %84 = vmatprep.subr.mxu0 0.0
    %85 = vmatpush1.msra.mxu0 0.0
    %86 = vmatprep.subr.mxu0 0.0
    %87 = vmatpush1.msra.mxu0 0.0
    %88 = vmatprep.subr.mxu0 0.0
    %89 = vmatpush1.msra.mxu0 0.0
    %90 = vmatprep.subr.mxu0 0.0
    %91 = vmatpush1.msra.mxu0 0.0
    %92 = vmatprep.subr.mxu0 0.0
    %93 = vmatpush1.msra.mxu0 0.0
    %94 = vmatprep.subr.mxu0 0.0
    %95 = vmatpush1.msra.mxu0 0.0
    %96 = vmatprep.subr.mxu0 %v52
    %97 = vmatpush1.msra.mxu0 %v51
    %98 = vmatprep.subr.mxu0 %v50
    %99 = vmatpush1.msra.mxu0 %v49
    %100 = vmatprep.subr.mxu0 %v48
    %101 = vmatpush1.msra.mxu0 %v47
    %102 = vmatprep.subr.mxu0 %v46
    %103 = vmatpush1.msra.mxu0 %v45
    %104 = vmatprep.subr.mxu0 0.0
    %105 = vmatpush2.msra.mxu0 0.0
    %106 = vmatprep.subr.mxu0 0.0
    %107 = vmatpush2.msra.mxu0 0.0
    %108 = vmatprep.subr.mxu0 0.0
    %109 = vmatpush2.msra.mxu0 0.0
    %110 = vmatprep.subr.mxu0 0.0
    %111 = vmatpush2.msra.mxu0 0.0
    %112 = vmatprep.subr.mxu0 0.0
    %113 = vmatpush2.msra.mxu0 0.0
    %114 = vmatprep.subr.mxu0 0.0
    %115 = vmatpush2.msra.mxu0 0.0
    %116 = vmatprep.subr.mxu0 0.0
    %117 = vmatpush2.msra.mxu0 0.0
    %118 = vmatprep.subr.mxu0 0.0
    %119 = vmatpush2.msra.mxu0 0.0
    %120 = vmatprep.subr.mxu0 0.0
    %121 = vmatpush2.msra.mxu0 0.0
    %122 = vmatprep.subr.mxu0 0.0
    %123 = vmatpush2.msra.mxu0 0.0
    %124 = vmatprep.subr.mxu0 0.0
    %125 = vmatpush2.msra.mxu0 0.0
    %126 = vmatprep.subr.mxu0 0.0
    %127 = vmatpush2.msra.mxu0 0.0
    %128 = vmatprep.subr.mxu0 0.0
    %129 = vmatpush2.msra.mxu0 0.0
    %130 = vmatprep.subr.mxu0 0.0
    %131 = vmatpush2.msra.mxu0 0.0
    %132 = vmatprep.subr.mxu0 0.0
    %133 = vmatpush2.msra.mxu0 0.0
    %134 = vmatprep.subr.mxu0 0.0
    %135 = vmatpush2.msra.mxu0 0.0
    %136 = vmatprep.mubr.f32.mxu0 0.0
    %137 = vmatmul.mubr.f32.gmra.mxu0 %v67
    %v138 = vpop.f32.mrf.mxu0
    %v139 = vadd.f32 %v58, %v138
    %v140 = vpop.f32.mrf.mxu0
    %v141 = vadd.f32 %v62, %v140
    %142 = vmatprep.mubr.f32.mxu0 0.0
    %143 = vmatmul.mubr.f32.gmra.mxu0 %v70
    %v144 = vpop.f32.mrf.mxu0
    %v145 = vadd.f32 %v58, %v144
    %v146 = vpop.f32.mrf.mxu0
    %v147 = vadd.f32 %v62, %v146
    %148 = vdwg.mxu0
    %v149 = vmax.f32 %v139, %v141
    %150 = vmax.xlane.f32.xlu0 %v149
    %v151 = vpop.xlane.xlu0 %150
    %v152 = vmax.f32 %v145, %v147
    %153 = vmax.xlane.f32.xlu0 %v152
    %v154 = vpop.xlane.xlu0 %153
    %v155 = vsub.f32 %v139, %v151
    %v156 = vsub.f32 %v141, %v151
    %v157 = vsub.f32 %v145, %v154
    %v158 = vsub.f32 %v147, %v154
    %v159 = vmul.f32 %v155, 1.442695
    %v160 = vpow.pop %v159
    %v161 = vmul.f32 %v156, 1.442695
    %v162 = vpow.pop %v161
    %v163 = vmul.f32 %v157, 1.442695
    %v164 = vpow.pop %v163
    %v165 = vmul.f32 %v158, 1.442695
    %v166 = vpow.pop %v165
    %v167 = vadd.f32 %v160, %v162
    %168 = vadd.xlane.f32.xlu0 %v167
    %v169 = vpop.xlane.xlu0 %168
    %v170 = vadd.f32 %v164, %v166
    %171 = vadd.xlane.f32.xlu0 %v170
    %v172 = vpop.xlane.xlu0 %171
    %v173 = vlog2.pop %v169
    %v174 = vmul.f32 %v173, 0.6931472
    %v175 = vlog2.pop %v172
    %v176 = vmul.f32 %v175, 0.6931472
    %v177 = vsub.f32 %v155, %v174
    %v178 = vsub.f32 %v156, %v174
    %v179 = vsub.f32 %v157, %v176
    %v180 = vsub.f32 %v158, %v176
    %181 = vst [vmem:[#allocation7] sm:$0xff] %v177
    %182 = vst [vmem:[#allocation7 + $0x8] sm:$0xff] %v178
    %183 = vst [vmem:[#allocation7 + $0x10] sm:$0xff] %v179
    %184 = vst [vmem:[#allocation7 + $0x18] sm:$0xff] %v180
    // Predicated region
    $region22: #{tpu_custom_call.1} parent=1 // pred_check
      _
    $region23: #{tpu_custom_call.1} parent=1 // pred_check_branch
      %186 = sbr.rel (0) target = $region25
    $region24: #{tpu_custom_call.1} parent=1 // pred_region
      %s188 = ssub.s32 512, 512
      %189 = vsyncadd [#allocation4], %s188
      %s190 = sshll.u32 [#allocation7], 4
      %s191 = int_to_ptr.vmem [resolvable:$true] %s190
      %196 = dma.vmem_to_hbm [thread:$0]  %s191, 512, %s3, [#allocation4], 256, 256, 16
    $region25: #{tpu_custom_call.1} parent=1 // pred_fallthru
      _
    // Predicated region
    $region26: #{tpu_custom_call.1} parent=1 // pred_check
      _
    $region27: #{tpu_custom_call.1} parent=1 // pred_check_branch
      %198 = sbr.rel (0) target = $region29
    $region28: #{tpu_custom_call.1} parent=1 // pred_region
      %199 = dma.done [#allocation4], 512
    $region29: #{tpu_custom_call.1} parent=1 // pred_fallthru
      _
    %200 = vsyncpa [#allocation3], 1
    %201 = vsyncpa [#allocation6], 1
    %202 = vsyncpa [#allocation4], 1

// kernel: tpu_custom_call.1
$region0: #{tpu_custom_call.1}
  #allocation0 [shape = 'u32[]', space=smem, size = 0x4, offset = 0x4, fixed_abs, tag = 'smem constant byte address 0x4 - core index']
  #allocation1 [shape = 'u32[144,128]{1,0:T(1,128)}', space=vmem, size = 0x12000, scoped, tag = 'internal scratch']
  %s0 = inlined_call_operand.hbm [shape: f32[16,32], index: 0, kind: input, shape index: {}]
  %s1 = inlined_call_operand.hbm [shape: f32[32,256], index: 1, kind: input, shape index: {}]
  %s2 = inlined_call_operand.vmem [shape: f32[1,256], index: 2, kind: input, shape index: {}]
  %s3 = inlined_call_operand.hbm [shape: f32[16,256], index: 3, kind: output, shape index: {}]
  %s4 = sld [smem:[#allocation0]]
  $region30: #{tpu_custom_call.1} parent=0
    _
  %s6 = ssub.s32 1, %s4
  %s7 = scalar_select 0, %s6, %s4
  $region1: #{tpu_custom_call.1} parent=0
    #allocation2 [shape = 'u8[8192]{0}', space=vmem, size = 0x2000, scoped, tag = 'input window, operand 0, single buffered']
    #allocation3 [shape = 's32[1]{0}', space=sflag, size = 0x4, scoped, tag = 'scoped memory for tpu_custom_call.1']
    #allocation4 [shape = 's32[1]{0}', space=sflag, size = 0x4, scoped, tag = 'scoped memory for tpu_custom_call.1']
    #allocation5 [shape = 'u8[32768]{0}', space=vmem, size = 0x8000, scoped, tag = 'input window, operand 1, single buffered']
    #allocation6 [shape = 's32[1]{0}', space=sflag, size = 0x4, scoped, tag = 'scoped memory for tpu_custom_call.1']
    #allocation7 [shape = 'u8[16384]{0}', space=vmem, size = 0x4000, scoped, tag = 'output window, operand 0, single buffered']
    %8 = vsyncpa [#allocation3], 0
    %9 = vsyncpa [#allocation6], 0
    %10 = vsyncpa [#allocation4], 0
    // Predicated region
    $region2: #{tpu_custom_call.1} parent=1 // pred_check
      _
    $region3: #{tpu_custom_call.1} parent=1 // pred_check_branch
      %12 = sbr.rel (0) target = $region5
    $region4: #{tpu_custom_call.1} parent=1 // pred_region
      %s14 = ssub.s32 256, 256
      %15 = vsyncadd [#allocation3], %s14
      %s16 = sshll.u32 [#allocation2], 4
      %s17 = int_to_ptr.vmem [resolvable:$true] %s16
      %22 = dma.hbm_to_vmem [thread:$0]  %s0, 256, %s17, [#allocation3], 128, 128, 8
    $region5: #{tpu_custom_call.1} parent=1 // pred_fallthru
      _
    // Predicated region
    $region6: #{tpu_custom_call.1} parent=1 // pred_check
      _
    $region7: #{tpu_custom_call.1} parent=1 // pred_check_branch
      %24 = sbr.rel (0) target = $region9
    $region8: #{tpu_custom_call.1} parent=1 // pred_region
      %s26 = ssub.s32 1024, 1024
      %27 = vsyncadd [#allocation6], %s26
      %s28 = sshll.u32 [#allocation5], 4
      %s29 = int_to_ptr.vmem [resolvable:$true] %s28
      %34 = dma.hbm_to_vmem [thread:$0]  %s1, 1024, %s29, [#allocation6], 256, 256, 16
    $region9: #{tpu_custom_call.1} parent=1 // pred_fallthru
      _
    // Predicated region
    $region10: #{tpu_custom_call.1} parent=1 // pred_check
      _
    $region11: #{tpu_custom_call.1} parent=1 // pred_check_branch
      %36 = sbr.rel (0) target = $region13
    $region12: #{tpu_custom_call.1} parent=1 // pred_region
      _
    $region13: #{tpu_custom_call.1} parent=1 // pred_fallthru
      _
    // Predicated region
    $region14: #{tpu_custom_call.1} parent=1 // pred_check
      _
    $region15: #{tpu_custom_call.1} parent=1 // pred_check_branch
      %38 = sbr.rel (0) target = $region17
    $region16: #{tpu_custom_call.1} parent=1 // pred_region
      %39 = dma.done [#allocation3], 256
    $region17: #{tpu_custom_call.1} parent=1 // pred_fallthru
      _
    // Predicated region
    $region18: #{tpu_custom_call.1} parent=1 // pred_check
      _
    $region19: #{tpu_custom_call.1} parent=1 // pred_check_branch
      %41 = sbr.rel (0) target = $region21
    $region20: #{tpu_custom_call.1} parent=1 // pred_region
      %42 = dma.done [#allocation6], 1024
    $region21: #{tpu_custom_call.1} parent=1 // pred_fallthru
      _
    %v43 = vld [vmem:[#allocation2] sm:$0xff]
    %v44 = vld [vmem:[#allocation2 + $0x8] sm:$0xff]
    %v45 = vld [vmem:[#allocation5] sm:$0xff]
    %v46 = vld [vmem:[#allocation5 + $0x8] sm:$0xff]
    %v47 = vld [vmem:[#allocation5 + $0x10] sm:$0xff]
    %v48 = vld [vmem:[#allocation5 + $0x18] sm:$0xff]
    %v49 = vld [vmem:[#allocation5 + $0x20] sm:$0xff]
    %v50 = vld [vmem:[#allocation5 + $0x28] sm:$0xff]
    %v51 = vld [vmem:[#allocation5 + $0x30] sm:$0xff]
    %v52 = vld [vmem:[#allocation5 + $0x38] sm:$0xff]
    %v53 = vld [vmem:[%s2] sm:$0x3]
    %v55 = vlaneseq
    %v56 = vshrl.u32 %v55, 7
    %v57 = vsub.s32 0, %v56
    %v58 = vrot.slane %v53, %v57
    %v59 = vlaneseq
    %v60 = vshrl.u32 %v59, 7
    %v61 = vsub.s32 1, %v60
    %v62 = vrot.slane %v53, %v61
    %vm65 = vcmask 261120
    %v67 = vsel %vm65, %v43, 0
    %v70 = vsel %vm65, %v44, 0
    %72 = vmatprep.subr.mxu0 0.0
    %73 = vmatpush1.msra.mxu0 0.0
    %74 = vmatprep.subr.mxu0 0.0
    %75 = vmatpush1.msra.mxu0 0.0
    %76 = vmatprep.subr.mxu0 0.0
    %77 = vmatpush1.msra.mxu0 0.0
    %78 = vmatprep.subr.mxu0 0.0
    %79 = vmatpush1.msra.mxu0 0.0
    %80 = vmatprep.subr.mxu0 0.0
    %81 = vmatpush1.msra.mxu0 0.0
    %82 = vmatprep.subr.mxu0 0.0
    %83 = vmatpush1.msra.mxu0 0.0
    %84 = vmatprep.subr.mxu0 0.0
    %85 = vmatpush1.msra.mxu0 0.0
    %86 = vmatprep.subr.mxu0 0.0
    %87 = vmatpush1.msra.mxu0 0.0
    %88 = vmatprep.subr.mxu0 0.0
    %89 = vmatpush1.msra.mxu0 0.0
    %90 = vmatprep.subr.mxu0 0.0
    %91 = vmatpush1.msra.mxu0 0.0
    %92 = vmatprep.subr.mxu0 0.0
    %93 = vmatpush1.msra.mxu0 0.0
    %94 = vmatprep.subr.mxu0 0.0
    %95 = vmatpush1.msra.mxu0 0.0
    %96 = vmatprep.subr.mxu0 %v52
    %97 = vmatpush1.msra.mxu0 %v51
    %98 = vmatprep.subr.mxu0 %v50
    %99 = vmatpush1.msra.mxu0 %v49
    %100 = vmatprep.subr.mxu0 %v48
    %101 = vmatpush1.msra.mxu0 %v47
    %102 = vmatprep.subr.mxu0 %v46
    %103 = vmatpush1.msra.mxu0 %v45
    %104 = vmatprep.subr.mxu0 0.0
    %105 = vmatpush2.msra.mxu0 0.0
    %106 = vmatprep.subr.mxu0 0.0
    %107 = vmatpush2.msra.mxu0 0.0
    %108 = vmatprep.subr.mxu0 0.0
    %109 = vmatpush2.msra.mxu0 0.0
    %110 = vmatprep.subr.mxu0 0.0
    %111 = vmatpush2.msra.mxu0 0.0
    %112 = vmatprep.subr.mxu0 0.0
    %113 = vmatpush2.msra.mxu0 0.0
    %114 = vmatprep.subr.mxu0 0.0
    %115 = vmatpush2.msra.mxu0 0.0
    %116 = vmatprep.subr.mxu0 0.0
    %117 = vmatpush2.msra.mxu0 0.0
    %118 = vmatprep.subr.mxu0 0.0
    %119 = vmatpush2.msra.mxu0 0.0
    %120 = vmatprep.subr.mxu0 0.0
    %121 = vmatpush2.msra.mxu0 0.0
    %122 = vmatprep.subr.mxu0 0.0
    %123 = vmatpush2.msra.mxu0 0.0
    %124 = vmatprep.subr.mxu0 0.0
    %125 = vmatpush2.msra.mxu0 0.0
    %126 = vmatprep.subr.mxu0 0.0
    %127 = vmatpush2.msra.mxu0 0.0
    %128 = vmatprep.subr.mxu0 0.0
    %129 = vmatpush2.msra.mxu0 0.0
    %130 = vmatprep.subr.mxu0 0.0
    %131 = vmatpush2.msra.mxu0 0.0
    %132 = vmatprep.subr.mxu0 0.0
    %133 = vmatpush2.msra.mxu0 0.0
    %134 = vmatprep.subr.mxu0 0.0
    %135 = vmatpush2.msra.mxu0 0.0
    %136 = vmatprep.mubr.f32.mxu0 0.0
    %137 = vmatmul.mubr.f32.gmra.mxu0 %v67
    %v138 = vpop.f32.mrf.mxu0
    %v139 = vadd.f32 %v58, %v138
    %v140 = vpop.f32.mrf.mxu0
    %v141 = vadd.f32 %v62, %v140
    %142 = vmatprep.mubr.f32.mxu0 0.0
    %143 = vmatmul.mubr.f32.gmra.mxu0 %v70
    %v144 = vpop.f32.mrf.mxu0
    %v145 = vadd.f32 %v58, %v144
    %v146 = vpop.f32.mrf.mxu0
    %v147 = vadd.f32 %v62, %v146
    %148 = vdwg.mxu0
    %v149 = vmax.f32 %v139, %v141
    %150 = vmax.xlane.f32.xlu0 %v149
    %v151 = vpop.xlane.xlu0 %150
    %v152 = vmax.f32 %v145, %v147
    %153 = vmax.xlane.f32.xlu0 %v152
    %v154 = vpop.xlane.xlu0 %153
    %v155 = vsub.f32 %v139, %v151
    %v156 = vsub.f32 %v141, %v151
    %v157 = vsub.f32 %v145, %v154
    %v158 = vsub.f32 %v147, %v154
    %v159 = vmul.f32 %v155, 1.442695
    %v160 = vpow.pop %v159
    %v161 = vmul.f32 %v156, 1.442695
    %v162 = vpow.pop %v161
    %v163 = vmul.f32 %v157, 1.442695
    %v164 = vpow.pop %v163
    %v165 = vmul.f32 %v158, 1.442695
    %v166 = vpow.pop %v165
    %v167 = vadd.f32 %v160, %v162
    %168 = vadd.xlane.f32.xlu0 %v167
    %v169 = vpop.xlane.xlu0 %168
    %v170 = vadd.f32 %v164, %v166
    %171 = vadd.xlane.f32.xlu0 %v170
    %v172 = vpop.xlane.xlu0 %171
    %v173 = vlog2.pop %v169
    %v174 = vmul.f32 %v173, 0.6931472
    %v175 = vlog2.pop %v172
    %v176 = vmul.f32 %v175, 0.6931472
    %v177 = vsub.f32 %v155, %v174
    %v178 = vsub.f32 %v156, %v174
    %v179 = vsub.f32 %v157, %v176
    %v180 = vsub.f32 %v158, %v176
    %181 = vst [vmem:[#allocation7] sm:$0xff] %v177
    %182 = vst [vmem:[#allocation7 + $0x8] sm:$0xff] %v178
    %183 = vst [vmem:[#allocation7 + $0x10] sm:$0xff] %v179
    %184 = vst [vmem:[#allocation7 + $0x18] sm:$0xff] %v180
    // Predicated region
    $region22: #{tpu_custom_call.1} parent=1 // pred_check
      _
    $region23: #{tpu_custom_call.1} parent=1 // pred_check_branch
      %186 = sbr.rel (0) target = $region25
    $region24: #{tpu_custom_call.1} parent=1 // pred_region
      %s188 = ssub.s32 512, 512
      %189 = vsyncadd [#allocation4], %s188
      %s190 = sshll.u32 [#allocation7], 4
      %s191 = int_to_ptr.vmem [resolvable:$true] %s190
      %196 = dma.vmem_to_hbm [thread:$0]  %s191, 512, %s3, [#allocation4], 256, 256, 16
    $region25: #{tpu_custom_call.1} parent=1 // pred_fallthru
      _
    // Predicated region
    $region26: #{tpu_custom_call.1} parent=1 // pred_check
      _
    $region27: #{tpu_custom_call.1} parent=1 // pred_check_branch
      %198 = sbr.rel (0) target = $region29
    $region28: #{tpu_custom_call.1} parent=1 // pred_region
      %199 = dma.done [#allocation4], 512
    $region29: #{tpu_custom_call.1} parent=1 // pred_fallthru
      _
    %200 = vsyncpa [#allocation3], 1
    %201 = vsyncpa [#allocation6], 1
    %202 = vsyncpa [#allocation4], 1

</llo_original>
